<compile_context>
chip_gen: v7x
topology: tpu7x:2x2x1
jax: 0.10.0
libtpu: 0.0.40
codegen_flags: <defaults>
</compile_context>

<pallas_src>
import functools

import jax
import jax.numpy as jnp
from jax import lax
from jax.experimental import pallas as pl
from jax.experimental.pallas import tpu as pltpu


def critic_kernel(ids_ref, emb_ref, wm_ref, bm_ref, wvt_ref, bv_ref,
                  out_ref, acc_ref, *, inv_denom, bf16_tanh):
    # ids_ref : [TB, TS, 1] int32  token ids (streamed)
    # emb_ref : [Vp, Hp]    bf16   embedding table (VMEM resident)
    # wm_ref  : [Hp, Hp]    bf16   base-model dense weight (VMEM resident)
    # bm_ref  : [1, Hp]     f32    base-model dense bias (resident)
    # wvt_ref : [1, Hp]     f32    value-head weight, transposed (resident)
    # bv_ref  : [1, 1]      f32    value-head bias (SMEM scalar)
    # out_ref : [TB, 1]     f32    per-example value (written at finalize)
    # acc_ref : [TB, Hp]    f32    running sum_s h[b, s, :] (VMEM scratch)
    k = pl.program_id(1)
    num_k = pl.num_programs(1)
    tb, ts, _ = ids_ref.shape
    vp, hp = emb_ref.shape
    m = tb * ts

    @pl.when(k == 0)
    def _init():
        acc_ref[...] = jnp.zeros_like(acc_ref)

    # Fused embedding gather: one-hot(ids) @ Emb on the MXU.  Only tiny int32
    # blocks stream from HBM; x never exists in HBM.
    ids2 = ids_ref[...].reshape(m, 1)                         # tile-aligned reshape
    viota = lax.broadcasted_iota(jnp.int32, (m, vp), 1)
    onehot = (ids2 == viota).astype(jnp.bfloat16)             # [M, Vp]
    x2 = jnp.dot(onehot, emb_ref[...],
                 preferred_element_type=jnp.float32).astype(jnp.bfloat16)

    # Base model layer: tanh(x @ Wm + bm) — bf16 MXU inputs, f32 accumulation.
    z = jnp.dot(x2, wm_ref[...], preferred_element_type=jnp.float32) + bm_ref[...]
    if bf16_tanh:
        # v6e/v7x bf16 EUP: ~2x tanh throughput; S-sum accumulation stays f32.
        h2 = jnp.tanh(z.astype(jnp.bfloat16)).astype(jnp.float32)
    else:
        h2 = jnp.tanh(z)
    h = h2.reshape(tb, ts, hp)                                # tile-aligned reshape

    # Value head commutes with the sequence mean: accumulate per-example sums.
    acc_ref[...] += jnp.sum(h, axis=1)

    @pl.when(k == num_k - 1)
    def _finalize():
        # Drop the (global) last token: it is the last row of this final
        # S-tile — subtract just that row (single sublane pick, no reduce).
        hsum = acc_ref[...] - h[:, ts - 1, :]
        # Value head + mean as a VPU multiply + lane reduce (no N=1 MXU matmul).
        v = jnp.sum(hsum * wvt_ref[...], axis=-1, keepdims=True)   # [TB, 1]
        out_ref[...] = v * inv_denom + bv_ref[0, 0]


def _pad_axis(x, axis, mult):
    pad = (-x.shape[axis]) % mult
    if pad == 0:
        return x
    widths = [(0, 0)] * x.ndim
    widths[axis] = (0, pad)
    return jnp.pad(x, widths)


def _pick_tile(dim, target, align):
    """Largest divisor of `dim` that is a multiple of `align` and <= target,
    falling back to the full dim (full-extent blocks are always legal)."""
    if dim <= target or dim % align != 0:
        return dim
    t = (min(target, dim) // align) * align
    while t >= align:
        if dim % t == 0:
            return t
        t -= align
    return dim


def critic_forward(input_ids, params, action_mask=None, attention_mask=None,
                   *, tb=None, ts=None):
    """input_ids: [B, S] int32.  Returns value: [B] float32.

    Only the default path (use_action_mask=False) is implemented; action_mask
    and attention_mask are accepted for API parity with the PyTorch module.
    """
    # TODO(synk): masked_mean branch (use_action_mask=True) not implemented.
    del action_mask, attention_mask
    emb, wm, bm, wv, bv = (params["emb"], params["wm"], params["bm"],
                           params["wv"], params["bv"])
    B, S = input_ids.shape
    if S < 2:
        raise ValueError("Critic.forward requires S >= 2 (it drops the last token).")

    # Zero-pad H to 128 lanes and V to 128 (padding is exact: padded ids never
    # occur, padded h columns are tanh(0)=0 and padded wv entries are 0).
    emb_p = _pad_axis(_pad_axis(emb, 0, 128), 1, 128).astype(jnp.bfloat16)
    wm_p = _pad_axis(_pad_axis(wm, 0, 128), 1, 128).astype(jnp.bfloat16)
    bm_p = _pad_axis(bm, 1, 128)                      # [1, Hp] f32
    wvt_p = _pad_axis(wv.T, 1, 128)                   # [1, Hp] f32
    Vp, Hp = emb_p.shape
    assert wm_p.shape == (Hp, Hp)

    # ids as (B, S, 1) so token ids land on sublanes (lane dim 1): the in-kernel
    # reshape to (M, 1) for the one-hot build is tile-aligned / free.
    ids3 = input_ids.astype(jnp.int32)[..., None]

    # ---- tile / VMEM-budget selection (generation aware) --------------------
    # TB aligned to 8 sublanes (f32 out block); keep >= 2 B-tiles when possible
    # so the "parallel" B axis can shard across v7x's 2 TensorCores.
    TB = tb if tb is not None else _pick_tile(B, 8, 8)

    try:
        vmem_cap = int(pltpu.get_tpu_info().vmem_capacity_bytes)
    except Exception:
        vmem_cap = 64 * 1024 * 1024                   # conservative (v7x per-core)
    vmem_budget = min(vmem_cap * 3 // 4, 96 * 1024 * 1024)

    # Resident footprint (inputs conservatively counted double-buffered even
    # though their block never changes) + accumulator scratch.
    resident = 2 * (Vp * Hp * 2 + Hp * Hp * 2 + 2 * Hp * 4) + TB * Hp * 4
    if resident > vmem_budget:
        # TODO(synk): N-chunk Wm (column-tile its output axis via a third grid
        # axis) so very large H fits v7x's 64 MiB VMEM.
        raise NotImplementedError("resident Emb/Wm exceed the VMEM budget; "
                                  "Wm N-chunking not implemented")
    # Per-token (per row of M = TB*TS) working bytes: onehot(bf16) + x2(bf16)
    # + z/h f32 intermediates + double-buffered lane-padded int32 ids block.
    per_row = Vp * 2 + Hp * 2 + 2 * Hp * 4 + 2 * 128 * 4
    max_ts = (vmem_budget - resident) // max(1, TB * per_row)
    max_ts = max(16, min(2048, (max_ts // 16) * 16))
    TS = ts if ts is not None else _pick_tile(S, max_ts, 16)

    assert B % TB == 0 and S % TS == 0, (B, TB, S, TS)
    if TS % 8 != 0:
        # TODO(synk): ragged S (not a multiple of 8) needs masked tiles.
        raise NotImplementedError("S tile must be a multiple of 8")
    grid = (B // TB, S // TS)

    # bf16 tanh only where the EUP supports it (v6e / v7x) and H is small
    # enough that the EUP (not the MXU / HBM) would otherwise bind.
    kind = jax.devices()[0].device_kind.lower()
    bf16_tanh = (Hp <= 256) and any(t in kind for t in ("v6", "v7", "7x"))

    kernel = functools.partial(critic_kernel, inv_denom=1.0 / (S - 1),
                               bf16_tanh=bf16_tanh)
    value = pl.pallas_call(
        kernel,
        out_shape=jax.ShapeDtypeStruct((B, 1), jnp.float32),
        grid=grid,
        in_specs=[
            pl.BlockSpec((TB, TS, 1), lambda i, k: (i, k, 0)),   # ids tile (streamed)
            pl.BlockSpec((Vp, Hp), lambda i, k: (0, 0)),         # Emb (resident)
            pl.BlockSpec((Hp, Hp), lambda i, k: (0, 0)),         # Wm (resident)
            pl.BlockSpec((1, Hp), lambda i, k: (0, 0)),          # bm (resident)
            pl.BlockSpec((1, Hp), lambda i, k: (0, 0)),          # wv^T (resident)
            pl.BlockSpec(memory_space=pltpu.MemorySpace.SMEM),   # bv scalar
        ],
        out_specs=pl.BlockSpec((TB, 1), lambda i, k: (i, 0)),
        scratch_shapes=[pltpu.VMEM((TB, Hp), jnp.float32)],
        compiler_params=pltpu.CompilerParams(
            dimension_semantics=("parallel", "arbitrary"),
            vmem_limit_bytes=int(vmem_budget),
        ),
    )(ids3, emb_p, wm_p, bm_p, wvt_p, bv)
    return value[:, 0]


def critic_reference(input_ids, params):
    """Pure-JAX f32 reference mirroring the PyTorch forward (use_action_mask=False)."""
    emb, wm, bm, wv, bv = (params["emb"], params["wm"], params["bm"],
                           params["wv"], params["bv"])
    x = jnp.take(emb, input_ids, axis=0).astype(jnp.float32)
    h = jnp.tanh(jnp.einsum("bsh,hk->bsk", x, wm) + bm[0])
    values = (jnp.einsum("bsh,hk->bsk", h, wv) + bv[0, 0])[..., 0]   # squeeze(-1)
    values = values[:, :-1]
    return values.mean(axis=1)


def init_params(key, vocab=16, hidden=32):
    k_emb, k_wm, k_bm, k_wv, k_bv = jax.random.split(key, 5)
    scale = 0.1
    return {
        "emb": scale * jax.random.normal(k_emb, (vocab, hidden), jnp.float32),
        "wm": scale * jax.random.normal(k_wm, (hidden, hidden), jnp.float32),
        "bm": scale * jax.random.normal(k_bm, (1, hidden), jnp.float32),
        "wv": scale * jax.random.normal(k_wv, (hidden, 1), jnp.float32),
        "bv": scale * jax.random.normal(k_bv, (1, 1), jnp.float32),
    }


if __name__ == "__main__":
    # Small but multi-tile: grid = (B/TB, S/TS) = (2, 2) exercises the
    # parallel B axis, the fused in-kernel gather, the S accumulator, and the
    # drop-last-token finalize.
    B, S, H, V = 16, 32, 32, 16
    key = jax.random.PRNGKey(0)
    k_ids, k_params = jax.random.split(key)
    input_ids = jax.random.randint(k_ids, (B, S), 0, V, dtype=jnp.int32)
    attention_mask = jnp.ones((B, S), dtype=jnp.int32)  # accepted, unused
    params = init_params(k_params, vocab=V, hidden=H)

    value = critic_forward(input_ids, params, attention_mask=attention_mask,
                           tb=8, ts=16)
    value = jax.block_until_ready(value)

    ref = critic_reference(input_ids, params)
    assert value.shape == (B,), value.shape
    # bf16 weights/activations with f32 accumulation (intentional precision
    # loss vs the f32 reference): loosened tolerance.
    assert jnp.allclose(value, ref, atol=3e-3, rtol=3e-3), (value, ref)
    print("KERNEL_OK")
</pallas_src>

<mosaic_0001>
module attributes {stable_mosaic.version = 11 : i64} {
  func.func @critic_kernel(%arg0: i32, %arg1: i32, %arg2: memref<8x16x1xi32, #tpu.memory_space<vmem>>, %arg3: memref<128x128xbf16, #tpu.memory_space<vmem>>, %arg4: memref<128x128xbf16, #tpu.memory_space<vmem>>, %arg5: memref<1x128xf32, #tpu.memory_space<vmem>>, %arg6: memref<1x128xf32, #tpu.memory_space<vmem>>, %arg7: memref<1x1xf32, #tpu.memory_space<smem>>, %arg8: memref<8x1xf32, #tpu.memory_space<vmem>>, %arg9: memref<8x128xf32, #tpu.memory_space<vmem>>) attributes {dimension_semantics = [#tpu.dimension_semantics<parallel>, #tpu.dimension_semantics<arbitrary>], iteration_bounds = array<i64: 2, 2>, scalar_prefetch = 0 : i64, scratch_operands = 1 : i64, tpu.core_type = #tpu.core_type<tc>, window_params = [{transform_indices = @transform_0, window_bounds = array<i64: 8, 16, 1>}, {pipeline_mode = #tpu.pipeline_mode<synchronous>, transform_indices = @transform_1, window_bounds = array<i64: 128, 128>}, {pipeline_mode = #tpu.pipeline_mode<synchronous>, transform_indices = @transform_2, window_bounds = array<i64: 128, 128>}, {pipeline_mode = #tpu.pipeline_mode<synchronous>, transform_indices = @transform_3, window_bounds = array<i64: 1, 128>}, {pipeline_mode = #tpu.pipeline_mode<synchronous>, transform_indices = @transform_4, window_bounds = array<i64: 1, 128>}, {transform_indices = @transform_5, window_bounds = array<i64: 1, 1>}, {transform_indices = @transform_6, window_bounds = array<i64: 8, 1>}]} {
    %c0_i32 = arith.constant 0 : i32
    %0 = arith.cmpi eq, %arg1, %c0_i32 : i32
    %1 = arith.extui %0 : i1 to i32
    %c0_i32_0 = arith.constant 0 : i32
    %2 = arith.cmpi ne, %1, %c0_i32_0 : i32
    scf.if %2 {
      %cst_16 = arith.constant 0.000000e+00 : f32
      %28 = vector.broadcast %cst_16 : f32 to vector<8x128xf32>
      %c0_17 = arith.constant 0 : index
      %c0_18 = arith.constant 0 : index
      %29 = vector.load %arg9[%c0_17, %c0_18] : memref<8x128xf32, #tpu.memory_space<vmem>>, vector<8x128xf32>
      tpu.vector_store %arg9[%c0_17, %c0_18], %28 {strides = array<i32>} : memref<8x128xf32, #tpu.memory_space<vmem>>, vector<8x128xf32>,
    } else {
    }
    %c0 = arith.constant 0 : index
    %c0_1 = arith.constant 0 : index
    %c0_2 = arith.constant 0 : index
    %3 = vector.load %arg2[%c0, %c0_1, %c0_2] : memref<8x16x1xi32, #tpu.memory_space<vmem>>, vector<8x16x1xi32>
    %4 = vector.shape_cast %3 : vector<8x16x1xi32> to vector<128x1xi32>
    %5 = tpu.iota {dimensions = array<i32: 1>} : vector<128x128xi32>
    %6 = vector.broadcast %4 : vector<128x1xi32> to vector<128x128xi32>
    %7 = arith.cmpi eq, %6, %5 : vector<128x128xi32>
    %8 = arith.extui %7 : vector<128x128xi1> to vector<128x128xi32>
    %9 = arith.sitofp %8 : vector<128x128xi32> to vector<128x128xf32>
    %10 = arith.truncf %9 : vector<128x128xf32> to vector<128x128xbf16>
    %c0_3 = arith.constant 0 : index
    %c0_4 = arith.constant 0 : index
    %11 = vector.load %arg3[%c0_3, %c0_4] : memref<128x128xbf16, #tpu.memory_space<vmem>>, vector<128x128xbf16>
    %cst = arith.constant dense<0.000000e+00> : vector<128x128xf32>
    %12 = tpu.matmul %10, %11, %cst {dimension_numbers = #tpu.dot_dimension_numbers<[1], [0], [0], [1], [0, 0, 1, 1], [], []>} : vector<128x128xbf16>, vector<128x128xbf16>, vector<128x128xf32> -> vector<128x128xf32>
    %13 = arith.truncf %12 : vector<128x128xf32> to vector<128x128xbf16>
    %c0_5 = arith.constant 0 : index
    %c0_6 = arith.constant 0 : index
    %14 = vector.load %arg4[%c0_5, %c0_6] : memref<128x128xbf16, #tpu.memory_space<vmem>>, vector<128x128xbf16>
    %cst_7 = arith.constant dense<0.000000e+00> : vector<128x128xf32>
    %15 = tpu.matmul %13, %14, %cst_7 {dimension_numbers = #tpu.dot_dimension_numbers<[1], [0], [0], [1], [0, 0, 1, 1], [], []>} : vector<128x128xbf16>, vector<128x128xbf16>, vector<128x128xf32> -> vector<128x128xf32>
    %c0_8 = arith.constant 0 : index
    %c0_9 = arith.constant 0 : index
    %16 = vector.load %arg5[%c0_8, %c0_9] : memref<1x128xf32, #tpu.memory_space<vmem>>, vector<1x128xf32>
    %17 = vector.broadcast %16 : vector<1x128xf32> to vector<128x128xf32>
    %18 = arith.addf %15, %17 : vector<128x128xf32>
    %19 = math.tanh %18 : vector<128x128xf32>
    %20 = vector.shape_cast %19 : vector<128x128xf32> to vector<8x16x128xf32>
    %c0_10 = arith.constant 0 : index
    %c0_11 = arith.constant 0 : index
    %21 = vector.load %arg9[%c0_10, %c0_11] : memref<8x128xf32, #tpu.memory_space<vmem>>, vector<8x128xf32>
    %cst_12 = arith.constant dense<0.000000e+00> : vector<8x128xf32>
    %22 = vector.multi_reduction <add>, %20, %cst_12 [1] : vector<8x16x128xf32> to vector<8x128xf32>
    %23 = arith.addf %21, %22 : vector<8x128xf32>
    %c0_13 = arith.constant 0 : index
    %c0_14 = arith.constant 0 : index
    %24 = vector.load %arg9[%c0_13, %c0_14] : memref<8x128xf32, #tpu.memory_space<vmem>>, vector<8x128xf32>
    tpu.vector_store %arg9[%c0_13, %c0_14], %23 {strides = array<i32>} : memref<8x128xf32, #tpu.memory_space<vmem>>, vector<8x128xf32>,
    %c1_i32 = arith.constant 1 : i32
    %25 = arith.cmpi eq, %arg1, %c1_i32 : i32
    %26 = arith.extui %25 : i1 to i32
    %c0_i32_15 = arith.constant 0 : i32
    %27 = arith.cmpi ne, %26, %c0_i32_15 : i32
    scf.if %27 {
      %c0_16 = arith.constant 0 : index
      %c0_17 = arith.constant 0 : index
      %28 = vector.load %arg9[%c0_16, %c0_17] : memref<8x128xf32, #tpu.memory_space<vmem>>, vector<8x128xf32>
      %29 = vector.extract_strided_slice %20 {offsets = [0, 15, 0], sizes = [8, 1, 128], strides = [1, 1, 1]} : vector<8x16x128xf32> to vector<8x1x128xf32>
      %30 = vector.shape_cast %29 : vector<8x1x128xf32> to vector<8x128xf32>
      %31 = arith.subf %28, %30 : vector<8x128xf32>
      %c0_18 = arith.constant 0 : index
      %c0_19 = arith.constant 0 : index
      %32 = vector.load %arg6[%c0_18, %c0_19] : memref<1x128xf32, #tpu.memory_space<vmem>>, vector<1x128xf32>
      %33 = vector.broadcast %32 : vector<1x128xf32> to vector<8x128xf32>
      %34 = arith.mulf %31, %33 : vector<8x128xf32>
      %cst_20 = arith.constant dense<0.000000e+00> : vector<8xf32>
      %35 = vector.multi_reduction <add>, %34, %cst_20 [1] : vector<8x128xf32> to vector<8xf32>
      %36 = vector.shape_cast %35 : vector<8xf32> to vector<8x1xf32>
      %cst_21 = arith.constant 0.0322580636 : f32
      %37 = vector.broadcast %cst_21 : f32 to vector<8x1xf32>
      %38 = arith.mulf %36, %37 : vector<8x1xf32>
      %c0_22 = arith.constant 0 : index
      %c0_23 = arith.constant 0 : index
      %39 = memref.load %arg7[%c0_22, %c0_23] : memref<1x1xf32, #tpu.memory_space<smem>>
      %40 = vector.broadcast %39 : f32 to vector<8x1xf32>
      %41 = arith.addf %38, %40 : vector<8x1xf32>
      %c0_24 = arith.constant 0 : index
      %c0_25 = arith.constant 0 : index
      %42 = vector.load %arg8[%c0_24, %c0_25] : memref<8x1xf32, #tpu.memory_space<vmem>>, vector<8x1xf32>
      tpu.vector_store %arg8[%c0_24, %c0_25], %41 {strides = array<i32>} : memref<8x1xf32, #tpu.memory_space<vmem>>, vector<8x1xf32>,
    } else {
    }
    return
  }
  func.func @transform_0(%arg0: i32, %arg1: i32) -> (i32, i32, i32) {
    %c0_i32 = arith.constant 0 : i32
    %c0_i32_0 = arith.constant 0 : i32
    return %arg0, %arg1, %c0_i32 : i32, i32, i32
  }
  func.func @transform_1(%arg0: i32, %arg1: i32) -> (i32, i32) {
    %c0_i32 = arith.constant 0 : i32
    %c0_i32_0 = arith.constant 0 : i32
    %c0_i32_1 = arith.constant 0 : i32
    return %c0_i32, %c0_i32_0 : i32, i32
  }
  func.func @transform_2(%arg0: i32, %arg1: i32) -> (i32, i32) {
    %c0_i32 = arith.constant 0 : i32
    %c0_i32_0 = arith.constant 0 : i32
    %c0_i32_1 = arith.constant 0 : i32
    return %c0_i32, %c0_i32_0 : i32, i32
  }
  func.func @transform_3(%arg0: i32, %arg1: i32) -> (i32, i32) {
    %c0_i32 = arith.constant 0 : i32
    %c0_i32_0 = arith.constant 0 : i32
    %c0_i32_1 = arith.constant 0 : i32
    return %c0_i32, %c0_i32_0 : i32, i32
  }
  func.func @transform_4(%arg0: i32, %arg1: i32) -> (i32, i32) {
    %c0_i32 = arith.constant 0 : i32
    %c0_i32_0 = arith.constant 0 : i32
    %c0_i32_1 = arith.constant 0 : i32
    return %c0_i32, %c0_i32_0 : i32, i32
  }
  func.func @transform_5(%arg0: i32, %arg1: i32) -> (i32, i32) {
    %c0_i32 = arith.constant 0 : i32
    %c0_i32_0 = arith.constant 0 : i32
    %c0_i32_1 = arith.constant 0 : i32
    return %c0_i32, %c0_i32_0 : i32, i32
  }
  func.func @transform_6(%arg0: i32, %arg1: i32) -> (i32, i32) {
    %c0_i32 = arith.constant 0 : i32
    %c0_i32_0 = arith.constant 0 : i32
    return %arg0, %c0_i32 : i32, i32
  }
}

</mosaic_0001>

<llo_original>
// kernel: tpu_custom_call.1
$region0: #{tpu_custom_call.1}
  #allocation0 [shape = 'u32[]', space=smem, size = 0x4, offset = 0x4, fixed_abs, tag = 'smem constant byte address 0x4 - core index']
  #allocation1 [shape = 'u32[144,128]{1,0:T(1,128)}', space=vmem, size = 0x12000, scoped, tag = 'internal scratch']
  #allocation2 [shape = 'f32[8,128]{1,0:T(8,128)}', space=vmem, size = 0x1000, scoped, tag = 'scratch operand']
  #allocation3 [shape = 'f32[1,1]{1,0:T(1,128)S(6)}', space=smem, size = 0x200, scoped, tag = 'scoped memory for tpu_custom_call.1']
  %s0 = inlined_call_operand.vmem [shape: s32[16,32,1], index: 0, kind: input, shape index: {}]
  %s1 = inlined_call_operand.vmem [shape: bf16[128,128], index: 1, kind: input, shape index: {}]
  %s2 = inlined_call_operand.vmem [shape: bf16[128,128], index: 2, kind: input, shape index: {}]
  %s3 = inlined_call_operand.vmem [shape: f32[1,128], index: 3, kind: input, shape index: {}]
  %s4 = inlined_call_operand.vmem [shape: f32[1,128], index: 4, kind: input, shape index: {}]
  %s5 = inlined_call_operand.<no memory space> [shape: f32[1,1], index: 5, kind: input, shape index: {}]
  %s6 = inlined_call_operand.vmem [shape: f32[16,1], index: 6, kind: output, shape index: {}]
  %s7 = sld [smem:[#allocation0]]
  $region103: #{tpu_custom_call.1} parent=0
    _
  %s9 = ssub.s32 1, %s7
  %s10 = scalar_select 0, %s9, %s7
  %11 = sst [smem:[#allocation3]] %s5
  $region1: #{tpu_custom_call.1} parent=0
    #allocation4 [shape = 'u8[131072]{0}', space=vmem, size = 0x20000, scoped, tag = 'input window, operand 0']
    loop: start=0, step=1, limit=6
    $region2: #{tpu_custom_call.1} parent=1 // loop_pre_header
      _
    $region3: #{tpu_custom_call.1} parent=1 // loop_header
      %s13 = sphi 0, %s17
      %p14 = scmp.ge.s32.totalorder %s13, 6
      %s20 = sphi 0, %s32
      %s21 = sphi 0, %s28
      %s22 = sphi 0, %s20
      %s23 = sphi 0, %s21
      %s24 = sphi 0, %s22
      %s25 = sphi 0, %s23
      %s37 = sphi 0, %s39
      %s40 = sphi 0, %s37
      %s41 = sphi 0, %s40
      %s57 = sphi 0, %s41
      %s61 = sphi 0, %s61
      %s63 = sphi 0, %s61
      %s64 = sphi 0, %s63
      %s78 = sphi 0, %s64
      %s82 = sphi 0, %s82
      %s84 = sphi 0, %s82
      %s85 = sphi 0, %s84
      %s99 = sphi 0, %s85
      %s103 = sphi 0, %s103
      %s105 = sphi 0, %s103
      %s106 = sphi 0, %s105
      %s120 = sphi 0, %s106
      %s124 = sphi 0, %s124
      %s126 = sphi 0, %s124
      %s127 = sphi 0, %s126
      %s141 = sphi 0, %s127
      %s145 = sphi 0, %s145
      %s147 = sphi 0, %s145
      %s148 = sphi 0, %s147
      %s162 = sphi 0, %s148
      %s168 = sphi 0, %s170
      %s171 = sphi 0, %s168
      %s172 = sphi 0, %s171
      %s188 = sphi 0, %s172
    $region4: #{tpu_custom_call.1} parent=1 // loop_header_branch
      %16 = sbr.rel (%p14) target = $region8
    $region5: #{tpu_custom_call.1} parent=1 // loop_body
      %s18 = ssub.s32 %s13, 1
      %s19 = ssub.s32 %s13, 2
      %s26 = sadd.s32 1, %s21
      %p27 = scmp.ge.s32.totalorder %s26, 2
      %s28 = scalar_select %p27, 0, %s26
      %s29 = sadd.s32 1, %s20
      %s30 = scalar_select %p27, %s29, %s20
      %p31 = scmp.ge.s32.totalorder %s30, 2
      %s32 = scalar_select %p31, 0, %s30
      %s33 = ssub.s32 %s20, %s32
      %s34 = ssub.s32 %s21, %s28
      %s35 = sor.u32 %s33, %s34
      %p36 = scmp.eq.s32.totalorder %s35, 0
      %s38 = sadd.s32 %s37, 1
      %s39 = scalar_select %p36, %s37, %s38
      %p42 = pneg %p36
      %p43 = scmp.eq.s32.totalorder %s13, 3
      %p44 = por %p42, %p43
      %p45 = scmp.ne.s32.totalorder %s37, %s40
      %p46 = scmp.eq.s32.totalorder %s13, 0
      %p47 = por %p45, %p46
      %p48 = scmp.ne.s32.totalorder %s37, %s40
      %p49 = scmp.eq.s32.totalorder %s18, 3
      %p50 = por %p48, %p49
      %p51 = scmp.ne.s32.totalorder %s40, %s41
      %p52 = scmp.eq.s32.totalorder %s18, 0
      %p53 = por %p51, %p52
      %p54 = scmp.ne.s32.totalorder %s40, %s41
      %p55 = scmp.eq.s32.totalorder %s19, 3
      %p56 = por %p54, %p55
      %p58 = scmp.ne.s32.totalorder %s41, %s57
      %p59 = scmp.eq.s32.totalorder %s19, 0
      %p60 = por %p58, %p59
      %s62 = sadd.s32 %s61, 1
      %p65 = scmp.eq.s32.totalorder %s13, 3
      %p66 = scmp.ne.s32.totalorder %s61, %s63
      %p67 = scmp.eq.s32.totalorder %s13, 0
      %p68 = por %p66, %p67
      %p69 = scmp.ne.s32.totalorder %s61, %s63
      %p70 = scmp.eq.s32.totalorder %s18, 3
      %p71 = por %p69, %p70
      %p72 = scmp.ne.s32.totalorder %s63, %s64
      %p73 = scmp.eq.s32.totalorder %s18, 0
      %p74 = por %p72, %p73
      %p75 = scmp.ne.s32.totalorder %s63, %s64
      %p76 = scmp.eq.s32.totalorder %s19, 3
      %p77 = por %p75, %p76
      %p79 = scmp.ne.s32.totalorder %s64, %s78
      %p80 = scmp.eq.s32.totalorder %s19, 0
      %p81 = por %p79, %p80
      %s83 = sadd.s32 %s82, 1
      %p86 = scmp.eq.s32.totalorder %s13, 3
      %p87 = scmp.ne.s32.totalorder %s82, %s84
      %p88 = scmp.eq.s32.totalorder %s13, 0
      %p89 = por %p87, %p88
      %p90 = scmp.ne.s32.totalorder %s82, %s84
      %p91 = scmp.eq.s32.totalorder %s18, 3
      %p92 = por %p90, %p91
      %p93 = scmp.ne.s32.totalorder %s84, %s85
      %p94 = scmp.eq.s32.totalorder %s18, 0
      %p95 = por %p93, %p94
      %p96 = scmp.ne.s32.totalorder %s84, %s85
      %p97 = scmp.eq.s32.totalorder %s19, 3
      %p98 = por %p96, %p97
      %p100 = scmp.ne.s32.totalorder %s85, %s99
      %p101 = scmp.eq.s32.totalorder %s19, 0
      %p102 = por %p100, %p101
      %s104 = sadd.s32 %s103, 1
      %p107 = scmp.eq.s32.totalorder %s13, 3
      %p108 = scmp.ne.s32.totalorder %s103, %s105
      %p109 = scmp.eq.s32.totalorder %s13, 0
      %p110 = por %p108, %p109
      %p111 = scmp.ne.s32.totalorder %s103, %s105
      %p112 = scmp.eq.s32.totalorder %s18, 3
      %p113 = por %p111, %p112
      %p114 = scmp.ne.s32.totalorder %s105, %s106
      %p115 = scmp.eq.s32.totalorder %s18, 0
      %p116 = por %p114, %p115
      %p117 = scmp.ne.s32.totalorder %s105, %s106
      %p118 = scmp.eq.s32.totalorder %s19, 3
      %p119 = por %p117, %p118
      %p121 = scmp.ne.s32.totalorder %s106, %s120
      %p122 = scmp.eq.s32.totalorder %s19, 0
      %p123 = por %p121, %p122
      %s125 = sadd.s32 %s124, 1
      %p128 = scmp.eq.s32.totalorder %s13, 3
      %p129 = scmp.ne.s32.totalorder %s124, %s126
      %p130 = scmp.eq.s32.totalorder %s13, 0
      %p131 = por %p129, %p130
      %p132 = scmp.ne.s32.totalorder %s124, %s126
      %p133 = scmp.eq.s32.totalorder %s18, 3
      %p134 = por %p132, %p133
      %p135 = scmp.ne.s32.totalorder %s126, %s127
      %p136 = scmp.eq.s32.totalorder %s18, 0
      %p137 = por %p135, %p136
      %p138 = scmp.ne.s32.totalorder %s126, %s127
      %p139 = scmp.eq.s32.totalorder %s19, 3
      %p140 = por %p138, %p139
      %p142 = scmp.ne.s32.totalorder %s127, %s141
      %p143 = scmp.eq.s32.totalorder %s19, 0
      %p144 = por %p142, %p143
      %s146 = sadd.s32 %s145, 1
      %p149 = scmp.eq.s32.totalorder %s13, 3
      %p150 = scmp.ne.s32.totalorder %s145, %s147
      %p151 = scmp.eq.s32.totalorder %s13, 0
      %p152 = por %p150, %p151
      %p153 = scmp.ne.s32.totalorder %s145, %s147
      %p154 = scmp.eq.s32.totalorder %s18, 3
      %p155 = por %p153, %p154
      %p156 = scmp.ne.s32.totalorder %s147, %s148
      %p157 = scmp.eq.s32.totalorder %s18, 0
      %p158 = por %p156, %p157
      %p159 = scmp.ne.s32.totalorder %s147, %s148
      %p160 = scmp.eq.s32.totalorder %s19, 3
      %p161 = por %p159, %p160
      %p163 = scmp.ne.s32.totalorder %s148, %s162
      %p164 = scmp.eq.s32.totalorder %s19, 0
      %p165 = por %p163, %p164
      %s166 = ssub.s32 %s20, %s32
      %p167 = scmp.eq.s32.totalorder %s166, 0
      %s169 = sadd.s32 %s168, 1
      %s170 = scalar_select %p167, %s168, %s169
      %p173 = pneg %p167
      %p174 = scmp.eq.s32.totalorder %s13, 3
      %p175 = por %p173, %p174
      %p176 = scmp.ne.s32.totalorder %s168, %s171
      %p177 = scmp.eq.s32.totalorder %s13, 0
      %p178 = por %p176, %p177
      %p179 = scmp.ne.s32.totalorder %s168, %s171
      %p180 = scmp.eq.s32.totalorder %s18, 3
      %p181 = por %p179, %p180
      %p182 = scmp.ne.s32.totalorder %s171, %s172
      %p183 = scmp.eq.s32.totalorder %s18, 0
      %p184 = por %p182, %p183
      %p185 = scmp.ne.s32.totalorder %s171, %s172
      %p186 = scmp.eq.s32.totalorder %s19, 3
      %p187 = por %p185, %p186
      %p189 = scmp.ne.s32.totalorder %s172, %s188
      %p190 = scmp.eq.s32.totalorder %s19, 0
      %p191 = por %p189, %p190
      %p192 = scmp.le.s32.totalorder 1, %s13
      %p193 = scmp.lt.s32.totalorder %s13, 5
      %p194 = pnand %p192, %p193
      %p195 = pneg %p194
      // Predicated region
      $region9: #{tpu_custom_call.1} parent=5 // pred_check
        _
      $region10: #{tpu_custom_call.1} parent=5 // pred_check_branch
        %197 = sbr.rel (%p194) target = $region12
      $region11: #{tpu_custom_call.1} parent=5 // pred_region
        %s198 = ssub.s32 %s13, 1
        // Predicated region
        $region13: #{tpu_custom_call.1} parent=11 // pred_check
          %p199 = pneg %p74
        $region14: #{tpu_custom_call.1} parent=11 // pred_check_branch
          %201 = sbr.rel (%p199) target = $region16
        $region15: #{tpu_custom_call.1} parent=11 // pred_region
          _
        $region16: #{tpu_custom_call.1} parent=11 // pred_fallthru
          _
        // Predicated region
        $region17: #{tpu_custom_call.1} parent=11 // pred_check
          %p202 = pneg %p95
        $region18: #{tpu_custom_call.1} parent=11 // pred_check_branch
          %204 = sbr.rel (%p202) target = $region20
        $region19: #{tpu_custom_call.1} parent=11 // pred_region
          _
        $region20: #{tpu_custom_call.1} parent=11 // pred_fallthru
          _
        // Predicated region
        $region21: #{tpu_custom_call.1} parent=11 // pred_check
          %p205 = pneg %p116
        $region22: #{tpu_custom_call.1} parent=11 // pred_check_branch
          %207 = sbr.rel (%p205) target = $region24
        $region23: #{tpu_custom_call.1} parent=11 // pred_region
          _
        $region24: #{tpu_custom_call.1} parent=11 // pred_fallthru
          _
        // Predicated region
        $region25: #{tpu_custom_call.1} parent=11 // pred_check
          %p208 = pneg %p137
        $region26: #{tpu_custom_call.1} parent=11 // pred_check_branch
          %210 = sbr.rel (%p208) target = $region28
        $region27: #{tpu_custom_call.1} parent=11 // pred_region
          _
        $region28: #{tpu_custom_call.1} parent=11 // pred_fallthru
          _
        // Predicated region
        $region29: #{tpu_custom_call.1} parent=11 // pred_check
          %p211 = pneg %p158
        $region30: #{tpu_custom_call.1} parent=11 // pred_check_branch
          %213 = sbr.rel (%p211) target = $region32
        $region31: #{tpu_custom_call.1} parent=11 // pred_region
          _
        $region32: #{tpu_custom_call.1} parent=11 // pred_fallthru
          _
      $region12: #{tpu_custom_call.1} parent=5 // pred_fallthru
        _
      %p214 = scmp.lt.s32.totalorder %s13, 4
      // Predicated region
      $region33: #{tpu_custom_call.1} parent=5 // pred_check
        %p215 = pneg %p214
      $region34: #{tpu_custom_call.1} parent=5 // pred_check_branch
        %217 = sbr.rel (%p215) target = $region36
      $region35: #{tpu_custom_call.1} parent=5 // pred_region
        // Predicated region
        $region37: #{tpu_custom_call.1} parent=35 // pred_check
          %p218 = pneg %p47
        $region38: #{tpu_custom_call.1} parent=35 // pred_check_branch
          %220 = sbr.rel (%p218) target = $region40
        $region39: #{tpu_custom_call.1} parent=35 // pred_region
          %s221 = sand.u32 %s37, 1
          %s222 = sand.u32 %s37, 1
          %s223 = smul.addr %s222, 128
          %s224 = scalar_lea.vmem [#allocation4], %s223
          %s225 = smul.u32 8, %s20
          %s226 = smul.u32 2, %s21
          %s227 = smul.addr %s225, 4
          %s228 = sadd.s32 %s226, %s227
          %s229 = smul.addr %s228, 8
          %s230 = scalar_lea.vmem %s0, %s229
          // Predicated region
          $region41: #{tpu_custom_call.1} parent=39 // pred_check
            _
          $region42: #{tpu_custom_call.1} parent=39 // pred_check_branch
            %232 = sbr.rel (0) target = $region44
          $region43: #{tpu_custom_call.1} parent=39 // pred_region
            // Predicated region
            $region45: #{tpu_custom_call.1} parent=43 // pred_check
              _
            $region46: #{tpu_custom_call.1} parent=43 // pred_check_branch
              %234 = sbr.rel (0) target = $region48
            $region47: #{tpu_custom_call.1} parent=43 // pred_region
              // Predicated region
              $region60: #{tpu_custom_call.1} parent=47 // pred_check
                _
              $region61: #{tpu_custom_call.1} parent=47 // pred_check_branch
                %279 = sbr.rel (0) target = $region63
              $region62: #{tpu_custom_call.1} parent=47 // pred_region
                loop: start=0, step=1, limit=1
                $region64: #{tpu_custom_call.1} parent=62 // loop_pre_header
                  _
                $region65: #{tpu_custom_call.1} parent=62 // loop_header
                  %s281 = sphi 0, %s285
                  %p282 = scmp.ge.s32.totalorder %s281, 1
                  %s286 = sphi %s230, %s230
                  %s287 = sphi %s224, %s224
                $region66: #{tpu_custom_call.1} parent=62 // loop_header_branch
                  %284 = sbr.rel (%p282) target = $region70
                $region67: #{tpu_custom_call.1} parent=62 // loop_body
                  %v288 = vld [vmem:[%s286] sm:$0xff]
                  %289 = vst [vmem:[%s287] sm:$0xff] %v288
                  %v290 = vld [vmem:[%s286 + $0x8] sm:$0xff]
                  %291 = vst [vmem:[%s287 + $0x8] sm:$0xff] %v290
                  %v292 = vld [vmem:[%s286 + $0x20] sm:$0xff]
                  %293 = vst [vmem:[%s287 + $0x10] sm:$0xff] %v292
                  %v294 = vld [vmem:[%s286 + $0x28] sm:$0xff]
                  %295 = vst [vmem:[%s287 + $0x18] sm:$0xff] %v294
                  %v296 = vld [vmem:[%s286 + $0x40] sm:$0xff]
                  %297 = vst [vmem:[%s287 + $0x20] sm:$0xff] %v296
                  %v298 = vld [vmem:[%s286 + $0x48] sm:$0xff]
                  %299 = vst [vmem:[%s287 + $0x28] sm:$0xff] %v298
                  %v300 = vld [vmem:[%s286 + $0x60] sm:$0xff]
                  %301 = vst [vmem:[%s287 + $0x30] sm:$0xff] %v300
                  %v302 = vld [vmem:[%s286 + $0x68] sm:$0xff]
                  %303 = vst [vmem:[%s287 + $0x38] sm:$0xff] %v302
                  %v304 = vld [vmem:[%s286 + $0x80] sm:$0xff]
                  %305 = vst [vmem:[%s287 + $0x40] sm:$0xff] %v304
                  %v306 = vld [vmem:[%s286 + $0x88] sm:$0xff]
                  %307 = vst [vmem:[%s287 + $0x48] sm:$0xff] %v306
                  %v308 = vld [vmem:[%s286 + $0xa0] sm:$0xff]
                  %309 = vst [vmem:[%s287 + $0x50] sm:$0xff] %v308
                  %v310 = vld [vmem:[%s286 + $0xa8] sm:$0xff]
                  %311 = vst [vmem:[%s287 + $0x58] sm:$0xff] %v310
                  %v312 = vld [vmem:[%s286 + $0xc0] sm:$0xff]
                  %313 = vst [vmem:[%s287 + $0x60] sm:$0xff] %v312
                  %v314 = vld [vmem:[%s286 + $0xc8] sm:$0xff]
                  %315 = vst [vmem:[%s287 + $0x68] sm:$0xff] %v314
                  %v316 = vld [vmem:[%s286 + $0xe0] sm:$0xff]
                  %317 = vst [vmem:[%s287 + $0x70] sm:$0xff] %v316
                  %v318 = vld [vmem:[%s286 + $0xe8] sm:$0xff]
                  %319 = vst [vmem:[%s287 + $0x78] sm:$0xff] %v318
                $region68: #{tpu_custom_call.1} parent=62 // loop_footer
                  %s285 = sadd.s32 1, %s281
                $region69: #{tpu_custom_call.1} parent=62 // loop_footer_branch
                  %280 = sbr.rel target = $region65
                $region70: #{tpu_custom_call.1} parent=62 // loop_exit
                  _
              $region63: #{tpu_custom_call.1} parent=47 // pred_fallthru
                _
              // Predicated region
              $region71: #{tpu_custom_call.1} parent=47 // pred_check
                _
              $region72: #{tpu_custom_call.1} parent=47 // pred_check_branch
                %321 = sbr.rel target = $region74
              $region73: #{tpu_custom_call.1} parent=47 // pred_region
                _
              $region74: #{tpu_custom_call.1} parent=47 // pred_fallthru
                _
            $region48: #{tpu_custom_call.1} parent=43 // pred_fallthru
              _
            // Predicated region
            $region49: #{tpu_custom_call.1} parent=43 // pred_check
              _
            $region50: #{tpu_custom_call.1} parent=43 // pred_check_branch
              %236 = sbr.rel target = $region52
            $region51: #{tpu_custom_call.1} parent=43 // pred_region
              loop: start=0, step=1, limit=1
              $region53: #{tpu_custom_call.1} parent=51 // loop_pre_header
                _
              $region54: #{tpu_custom_call.1} parent=51 // loop_header
                %s239 = sphi 0, %s243
                %p240 = scmp.ge.s32.totalorder %s239, 1
                %s244 = sphi %s230, %s230
                %s245 = sphi %s224, %s224
              $region55: #{tpu_custom_call.1} parent=51 // loop_header_branch
                %242 = sbr.rel (%p240) target = $region59
              $region56: #{tpu_custom_call.1} parent=51 // loop_body
                %v246 = vld [vmem:[%s244] sm:$0xff]
                %247 = vst [vmem:[%s245] sm:$0xff] %v246
                %v248 = vld [vmem:[%s244 + $0x8] sm:$0xff]
                %249 = vst [vmem:[%s245 + $0x8] sm:$0xff] %v248
                %v250 = vld [vmem:[%s244 + $0x20] sm:$0xff]
                %251 = vst [vmem:[%s245 + $0x10] sm:$0xff] %v250
                %v252 = vld [vmem:[%s244 + $0x28] sm:$0xff]
                %253 = vst [vmem:[%s245 + $0x18] sm:$0xff] %v252
                %v254 = vld [vmem:[%s244 + $0x40] sm:$0xff]
                %255 = vst [vmem:[%s245 + $0x20] sm:$0xff] %v254
                %v256 = vld [vmem:[%s244 + $0x48] sm:$0xff]
                %257 = vst [vmem:[%s245 + $0x28] sm:$0xff] %v256
                %v258 = vld [vmem:[%s244 + $0x60] sm:$0xff]
                %259 = vst [vmem:[%s245 + $0x30] sm:$0xff] %v258
                %v260 = vld [vmem:[%s244 + $0x68] sm:$0xff]
                %261 = vst [vmem:[%s245 + $0x38] sm:$0xff] %v260
                %v262 = vld [vmem:[%s244 + $0x80] sm:$0xff]
                %263 = vst [vmem:[%s245 + $0x40] sm:$0xff] %v262
                %v264 = vld [vmem:[%s244 + $0x88] sm:$0xff]
                %265 = vst [vmem:[%s245 + $0x48] sm:$0xff] %v264
                %v266 = vld [vmem:[%s244 + $0xa0] sm:$0xff]
                %267 = vst [vmem:[%s245 + $0x50] sm:$0xff] %v266
                %v268 = vld [vmem:[%s244 + $0xa8] sm:$0xff]
                %269 = vst [vmem:[%s245 + $0x58] sm:$0xff] %v268
                %v270 = vld [vmem:[%s244 + $0xc0] sm:$0xff]
                %271 = vst [vmem:[%s245 + $0x60] sm:$0xff] %v270
                %v272 = vld [vmem:[%s244 + $0xc8] sm:$0xff]
                %273 = vst [vmem:[%s245 + $0x68] sm:$0xff] %v272
                %v274 = vld [vmem:[%s244 + $0xe0] sm:$0xff]
                %275 = vst [vmem:[%s245 + $0x70] sm:$0xff] %v274
                %v276 = vld [vmem:[%s244 + $0xe8] sm:$0xff]
                %277 = vst [vmem:[%s245 + $0x78] sm:$0xff] %v276
              $region57: #{tpu_custom_call.1} parent=51 // loop_footer
                %s243 = sadd.s32 1, %s239
              $region58: #{tpu_custom_call.1} parent=51 // loop_footer_branch
                %238 = sbr.rel target = $region54
              $region59: #{tpu_custom_call.1} parent=51 // loop_exit
                _
            $region52: #{tpu_custom_call.1} parent=43 // pred_fallthru
              _
          $region44: #{tpu_custom_call.1} parent=39 // pred_fallthru
            _
          %322 = vnop
        $region40: #{tpu_custom_call.1} parent=35 // pred_fallthru
          _
      $region36: #{tpu_custom_call.1} parent=5 // pred_fallthru
        _
      %p323 = scmp.le.s32.totalorder 1, %s13
      %p324 = scmp.lt.s32.totalorder %s13, 5
      %p325 = pnand %p323, %p324
      %p326 = pneg %p325
      // Predicated region
      $region75: #{tpu_custom_call.1} parent=5 // pred_check
        _
      $region76: #{tpu_custom_call.1} parent=5 // pred_check_branch
        %328 = sbr.rel (%p325) target = $region78
      $region77: #{tpu_custom_call.1} parent=5 // pred_region
        %s329 = ssub.s32 %s13, 1
        %s330 = sand.u32 %s40, 1
        %s331 = sand.u32 %s40, 1
        %s332 = smul.addr %s331, 128
        %s333 = scalar_lea.vmem [#allocation4], %s332
        // Predicated region
        $region79: #{tpu_custom_call.1} parent=77 // pred_check
          %p334 = pneg %p53
        $region80: #{tpu_custom_call.1} parent=77 // pred_check_branch
          %336 = sbr.rel (%p334) target = $region82
        $region81: #{tpu_custom_call.1} parent=77 // pred_region
          _
        $region82: #{tpu_custom_call.1} parent=77 // pred_fallthru
          _
        %s337 = sand.u32 %s40, 1
        %s338 = sand.u32 %s40, 1
        %s339 = smul.addr %s338, 128
        %s340 = scalar_lea.vmem [#allocation4], %s339
        %p341 = pneg %p53
        %p342 = pneg %p50
        %p343 = pneg %p74
        %p344 = pneg %p71
        %p345 = pneg %p95
        %p346 = pneg %p92
        %p347 = pneg %p116
        %p348 = pneg %p113
        %p349 = pneg %p137
        %p350 = pneg %p134
        %p351 = pneg %p158
        %p352 = pneg %p155
        %p353 = pneg %p184
        %p354 = pneg %p181
        %p355 = scmp.lt.s32.totalorder %s22, 1
        %s356 = scalar_select %p355, %s22, 1
        %s357 = smul.addr %s356, 8
        %s358 = scalar_lea.vmem %s6, %s357
        %s359 = smul.u32 8, %s22
        %s360 = smul.u32 2, %s23
        %p361 = scmp.lt.s32.totalorder %s22, 1
        %s362 = scalar_select %p361, %s22, 1
        %s363 = smul.addr %s362, 8
        %s364 = scalar_lea.vmem %s6, %s363
        %p366 = scmp.eq.s32.totalorder %s23, 0
        // Predicated region
        $region83: #{tpu_custom_call.1} parent=77 // pred_check
          %p367 = pneg %p366
        $region84: #{tpu_custom_call.1} parent=77 // pred_check_branch
          %369 = sbr.rel (%p367) target = $region86
        $region85: #{tpu_custom_call.1} parent=77 // pred_region
          %370 = vst [vmem:[#allocation2] sm:$0xff] 0.0
        $region86: #{tpu_custom_call.1} parent=77 // pred_fallthru
          _
        %v371 = vld [vmem:[%s333] sm:$0xff]
        %v372 = vld [vmem:[%s333 + $0x8] sm:$0xff]
        %v373 = vld [vmem:[%s333 + $0x10] sm:$0xff]
        %v374 = vld [vmem:[%s333 + $0x18] sm:$0xff]
        %v375 = vld [vmem:[%s333 + $0x20] sm:$0xff]
        %v376 = vld [vmem:[%s333 + $0x28] sm:$0xff]
        %v377 = vld [vmem:[%s333 + $0x30] sm:$0xff]
        %v378 = vld [vmem:[%s333 + $0x38] sm:$0xff]
        %v379 = vld [vmem:[%s333 + $0x40] sm:$0xff]
        %v380 = vld [vmem:[%s333 + $0x48] sm:$0xff]
        %v381 = vld [vmem:[%s333 + $0x50] sm:$0xff]
        %v382 = vld [vmem:[%s333 + $0x58] sm:$0xff]
        %v383 = vld [vmem:[%s333 + $0x60] sm:$0xff]
        %v384 = vld [vmem:[%s333 + $0x68] sm:$0xff]
        %v385 = vld [vmem:[%s333 + $0x70] sm:$0xff]
        %v386 = vld [vmem:[%s333 + $0x78] sm:$0xff]
        %v387 = vlaneseq
        %v388 = vand.u32 %v387, 127
        %389 = vset.pattern.permute.xlu0 0
        %390 = vperm.xlu0 %389, %v371
        %v391 = vpop.permute.xlu0 %390
        %392 = vset.pattern.permute.xlu0 0
        %393 = vperm.xlu0 %392, %v372
        %v394 = vpop.permute.xlu0 %393
        %395 = vset.pattern.permute.xlu0 0
        %396 = vperm.xlu0 %395, %v373
        %v397 = vpop.permute.xlu0 %396
        %398 = vset.pattern.permute.xlu0 0
        %399 = vperm.xlu0 %398, %v374
        %v400 = vpop.permute.xlu0 %399
        %401 = vset.pattern.permute.xlu0 0
        %402 = vperm.xlu0 %401, %v375
        %v403 = vpop.permute.xlu0 %402
        %404 = vset.pattern.permute.xlu0 0
        %405 = vperm.xlu0 %404, %v376
        %v406 = vpop.permute.xlu0 %405
        %407 = vset.pattern.permute.xlu0 0
        %408 = vperm.xlu0 %407, %v377
        %v409 = vpop.permute.xlu0 %408
        %410 = vset.pattern.permute.xlu0 0
        %411 = vperm.xlu0 %410, %v378
        %v412 = vpop.permute.xlu0 %411
        %413 = vset.pattern.permute.xlu0 0
        %414 = vperm.xlu0 %413, %v379
        %v415 = vpop.permute.xlu0 %414
        %416 = vset.pattern.permute.xlu0 0
        %417 = vperm.xlu0 %416, %v380
        %v418 = vpop.permute.xlu0 %417
        %419 = vset.pattern.permute.xlu0 0
        %420 = vperm.xlu0 %419, %v381
        %v421 = vpop.permute.xlu0 %420
        %422 = vset.pattern.permute.xlu0 0
        %423 = vperm.xlu0 %422, %v382
        %v424 = vpop.permute.xlu0 %423
        %425 = vset.pattern.permute.xlu0 0
        %426 = vperm.xlu0 %425, %v383
        %v427 = vpop.permute.xlu0 %426
        %428 = vset.pattern.permute.xlu0 0
        %429 = vperm.xlu0 %428, %v384
        %v430 = vpop.permute.xlu0 %429
        %431 = vset.pattern.permute.xlu0 0
        %432 = vperm.xlu0 %431, %v385
        %v433 = vpop.permute.xlu0 %432
        %434 = vset.pattern.permute.xlu0 0
        %435 = vperm.xlu0 %434, %v386
        %v436 = vpop.permute.xlu0 %435
        %vm437 = vcmp.eq.s32.totalorder %v391, %v388
        %vm438 = vcmp.eq.s32.totalorder %v394, %v388
        %vm439 = vcmp.eq.s32.totalorder %v397, %v388
        %vm440 = vcmp.eq.s32.totalorder %v400, %v388
        %vm441 = vcmp.eq.s32.totalorder %v403, %v388
        %vm442 = vcmp.eq.s32.totalorder %v406, %v388
        %vm443 = vcmp.eq.s32.totalorder %v409, %v388
        %vm444 = vcmp.eq.s32.totalorder %v412, %v388
        %vm445 = vcmp.eq.s32.totalorder %v415, %v388
        %vm446 = vcmp.eq.s32.totalorder %v418, %v388
        %vm447 = vcmp.eq.s32.totalorder %v421, %v388
        %vm448 = vcmp.eq.s32.totalorder %v424, %v388
        %vm449 = vcmp.eq.s32.totalorder %v427, %v388
        %vm450 = vcmp.eq.s32.totalorder %v430, %v388
        %vm451 = vcmp.eq.s32.totalorder %v433, %v388
        %vm452 = vcmp.eq.s32.totalorder %v436, %v388
        %v453 = vsel %vm437, 1, 0
        %v454 = vsel %vm438, 1, 0
        %v455 = vsel %vm439, 1, 0
        %v456 = vsel %vm440, 1, 0
        %v457 = vsel %vm441, 1, 0
        %v458 = vsel %vm442, 1, 0
        %v459 = vsel %vm443, 1, 0
        %v460 = vsel %vm444, 1, 0
        %v461 = vsel %vm445, 1, 0
        %v462 = vsel %vm446, 1, 0
        %v463 = vsel %vm447, 1, 0
        %v464 = vsel %vm448, 1, 0
        %v465 = vsel %vm449, 1, 0
        %v466 = vsel %vm450, 1, 0
        %v467 = vsel %vm451, 1, 0
        %v468 = vsel %vm452, 1, 0
        %v469 = vcvt.s32.f32 %v453
        %v470 = vcvt.s32.f32 %v454
        %v471 = vcvt.s32.f32 %v455
        %v472 = vcvt.s32.f32 %v456
        %v473 = vcvt.s32.f32 %v457
        %v474 = vcvt.s32.f32 %v458
        %v475 = vcvt.s32.f32 %v459
        %v476 = vcvt.s32.f32 %v460
        %v477 = vcvt.s32.f32 %v461
        %v478 = vcvt.s32.f32 %v462
        %v479 = vcvt.s32.f32 %v463
        %v480 = vcvt.s32.f32 %v464
        %v481 = vcvt.s32.f32 %v465
        %v482 = vcvt.s32.f32 %v466
        %v483 = vcvt.s32.f32 %v467
        %v484 = vcvt.s32.f32 %v468
        %v485 = vpack.c.bf16 %v470, %v469
        %v486 = vpack.c.bf16 %v472, %v471
        %v487 = vpack.c.bf16 %v474, %v473
        %v488 = vpack.c.bf16 %v476, %v475
        %v489 = vpack.c.bf16 %v478, %v477
        %v490 = vpack.c.bf16 %v480, %v479
        %v491 = vpack.c.bf16 %v482, %v481
        %v492 = vpack.c.bf16 %v484, %v483
        %v493 = vld [vmem:[%s1] sm:$0xf]
        %v494 = vld [vmem:[%s1 + $0x4] sm:$0xf]
        %v495 = vld [vmem:[%s1 + $0x8] sm:$0xf]
        %v496 = vld [vmem:[%s1 + $0xc] sm:$0xf]
        %v497 = vld [vmem:[%s1 + $0x10] sm:$0xf]
        %v498 = vld [vmem:[%s1 + $0x14] sm:$0xf]
        %v499 = vld [vmem:[%s1 + $0x18] sm:$0xf]
        %v500 = vld [vmem:[%s1 + $0x1c] sm:$0xf]
        %v501 = vld [vmem:[%s1 + $0x20] sm:$0xf]
        %v502 = vld [vmem:[%s1 + $0x24] sm:$0xf]
        %v503 = vld [vmem:[%s1 + $0x28] sm:$0xf]
        %v504 = vld [vmem:[%s1 + $0x2c] sm:$0xf]
        %v505 = vld [vmem:[%s1 + $0x30] sm:$0xf]
        %v506 = vld [vmem:[%s1 + $0x34] sm:$0xf]
        %v507 = vld [vmem:[%s1 + $0x38] sm:$0xf]
        %v508 = vld [vmem:[%s1 + $0x3c] sm:$0xf]
        %v525 = vunpack.c.l.b16 %v493
        %v526 = vunpack.c.l.b16 %v494
        %v527 = vunpack.c.l.b16 %v495
        %v528 = vunpack.c.l.b16 %v496
        %v529 = vunpack.c.l.b16 %v497
        %v530 = vunpack.c.l.b16 %v498
        %v531 = vunpack.c.l.b16 %v499
        %v532 = vunpack.c.l.b16 %v500
        %v533 = vunpack.c.l.b16 %v501
        %v534 = vunpack.c.l.b16 %v502
        %v535 = vunpack.c.l.b16 %v503
        %v536 = vunpack.c.l.b16 %v504
        %v537 = vunpack.c.l.b16 %v505
        %v538 = vunpack.c.l.b16 %v506
        %v539 = vunpack.c.l.b16 %v507
        %v540 = vunpack.c.l.b16 %v508
        %v541 = vpack.c.b16 %v526, %v525
        %v542 = vpack.c.b16 %v528, %v527
        %v543 = vpack.c.b16 %v530, %v529
        %v544 = vpack.c.b16 %v532, %v531
        %v545 = vpack.c.b16 %v534, %v533
        %v546 = vpack.c.b16 %v536, %v535
        %v547 = vpack.c.b16 %v538, %v537
        %v548 = vpack.c.b16 %v540, %v539
        %557 = vmatprep.subr.bf16.mxu0 0
        %558 = vmatpush1.bf16.msra.mxu0 %v541
        %559 = vmatprep.subr.bf16.mxu0 0
        %560 = vmatpush1.bf16.msra.mxu0 %v542
        %561 = vmatprep.subr.bf16.mxu0 0
        %562 = vmatpush1.bf16.msra.mxu0 %v543
        %563 = vmatprep.subr.bf16.mxu0 0
        %564 = vmatpush1.bf16.msra.mxu0 %v544
        %565 = vmatprep.subr.bf16.mxu0 0
        %566 = vmatpush1.bf16.msra.mxu0 %v545
        %567 = vmatprep.subr.bf16.mxu0 0
        %568 = vmatpush1.bf16.msra.mxu0 %v546
        %569 = vmatprep.subr.bf16.mxu0 0
        %570 = vmatpush1.bf16.msra.mxu0 %v547
        %571 = vmatprep.subr.bf16.mxu0 0
        %572 = vmatpush1.bf16.msra.mxu0 %v548
        %573 = vmatprep.subr.bf16.mxu0 0
        %574 = vmatpush1.bf16.msra.mxu0 0
        %575 = vmatprep.subr.bf16.mxu0 0
        %576 = vmatpush1.bf16.msra.mxu0 0
        %577 = vmatprep.subr.bf16.mxu0 0
        %578 = vmatpush1.bf16.msra.mxu0 0
        %579 = vmatprep.subr.bf16.mxu0 0
        %580 = vmatpush1.bf16.msra.mxu0 0
        %581 = vmatprep.subr.bf16.mxu0 0
        %582 = vmatpush1.bf16.msra.mxu0 0
        %583 = vmatprep.subr.bf16.mxu0 0
        %584 = vmatpush1.bf16.msra.mxu0 0
        %585 = vmatprep.subr.bf16.mxu0 0
        %586 = vmatpush1.bf16.msra.mxu0 0
        %587 = vmatprep.subr.bf16.mxu0 0
        %588 = vmatpush1.bf16.msra.mxu0 0
        %589 = vmatprep.mubr.bf16.mxu0 0
        %590 = vmatmul.mubr.bf16.gmra.mrb[0].mxu0 %v485
        %v591 = vpop.f32.mrb[0].mxu0
        %v592 = vadd.f32 0.0, %v591
        %v593 = vpop.f32.mrb[0].mxu0
        %v594 = vpop.f32.mrb[0].mxu0
        %v595 = vadd.f32 0.0, %v594
        %v596 = vpop.f32.mrb[0].mxu0
        %597 = vmatprep.mubr.bf16.mxu0 0
        %598 = vmatmul.mubr.bf16.gmra.mrb[0].mxu0 %v486
        %v599 = vpop.f32.mrb[0].mxu0
        %v600 = vadd.f32 0.0, %v599
        %v601 = vpop.f32.mrb[0].mxu0
        %v602 = vpop.f32.mrb[0].mxu0
        %v603 = vadd.f32 0.0, %v602
        %v604 = vpop.f32.mrb[0].mxu0
        %605 = vmatprep.mubr.bf16.mxu0 0
        %606 = vmatmul.mubr.bf16.gmra.mrb[0].mxu0 %v487
        %v607 = vpop.f32.mrb[0].mxu0
        %v608 = vadd.f32 0.0, %v607
        %v609 = vpop.f32.mrb[0].mxu0
        %v610 = vpop.f32.mrb[0].mxu0
        %v611 = vadd.f32 0.0, %v610
        %v612 = vpop.f32.mrb[0].mxu0
        %613 = vmatprep.mubr.bf16.mxu0 0
        %614 = vmatmul.mubr.bf16.gmra.mrb[0].mxu0 %v488
        %v615 = vpop.f32.mrb[0].mxu0
        %v616 = vadd.f32 0.0, %v615
        %v617 = vpop.f32.mrb[0].mxu0
        %v618 = vpop.f32.mrb[0].mxu0
        %v619 = vadd.f32 0.0, %v618
        %v620 = vpop.f32.mrb[0].mxu0
        %621 = vmatprep.mubr.bf16.mxu0 0
        %622 = vmatmul.mubr.bf16.gmra.mrb[0].mxu0 %v489
        %v623 = vpop.f32.mrb[0].mxu0
        %v624 = vadd.f32 0.0, %v623
        %v625 = vpop.f32.mrb[0].mxu0
        %v626 = vpop.f32.mrb[0].mxu0
        %v627 = vadd.f32 0.0, %v626
        %v628 = vpop.f32.mrb[0].mxu0
        %629 = vmatprep.mubr.bf16.mxu0 0
        %630 = vmatmul.mubr.bf16.gmra.mrb[0].mxu0 %v490
        %v631 = vpop.f32.mrb[0].mxu0
        %v632 = vadd.f32 0.0, %v631
        %v633 = vpop.f32.mrb[0].mxu0
        %v634 = vpop.f32.mrb[0].mxu0
        %v635 = vadd.f32 0.0, %v634
        %v636 = vpop.f32.mrb[0].mxu0
        %637 = vmatprep.mubr.bf16.mxu0 0
        %638 = vmatmul.mubr.bf16.gmra.mrb[0].mxu0 %v491
        %v639 = vpop.f32.mrb[0].mxu0
        %v640 = vadd.f32 0.0, %v639
        %v641 = vpop.f32.mrb[0].mxu0
        %v642 = vpop.f32.mrb[0].mxu0
        %v643 = vadd.f32 0.0, %v642
        %v644 = vpop.f32.mrb[0].mxu0
        %645 = vmatprep.mubr.bf16.mxu0 0
        %646 = vmatmul.mubr.bf16.gmra.mrb[0].mxu0 %v492
        %v647 = vpop.f32.mrb[0].mxu0
        %v648 = vadd.f32 0.0, %v647
        %v649 = vpop.f32.mrb[0].mxu0
        %v650 = vpop.f32.mrb[0].mxu0
        %v651 = vadd.f32 0.0, %v650
        %v652 = vpop.f32.mrb[0].mxu0
        %653 = vdwg.mxu0
        %v654 = vpack.c.bf16 %v595, %v592
        %v655 = vpack.c.bf16 %v603, %v600
        %v656 = vpack.c.bf16 %v611, %v608
        %v657 = vpack.c.bf16 %v619, %v616
        %v658 = vpack.c.bf16 %v627, %v624
        %v659 = vpack.c.bf16 %v635, %v632
        %v660 = vpack.c.bf16 %v643, %v640
        %v661 = vpack.c.bf16 %v651, %v648
        %v662 = vld [vmem:[%s2] sm:$0xf]
        %v663 = vld [vmem:[%s2 + $0x4] sm:$0xf]
        %v664 = vld [vmem:[%s2 + $0x8] sm:$0xf]
        %v665 = vld [vmem:[%s2 + $0xc] sm:$0xf]
        %v666 = vld [vmem:[%s2 + $0x10] sm:$0xf]
        %v667 = vld [vmem:[%s2 + $0x14] sm:$0xf]
        %v668 = vld [vmem:[%s2 + $0x18] sm:$0xf]
        %v669 = vld [vmem:[%s2 + $0x1c] sm:$0xf]
        %v670 = vld [vmem:[%s2 + $0x20] sm:$0xf]
        %v671 = vld [vmem:[%s2 + $0x24] sm:$0xf]
        %v672 = vld [vmem:[%s2 + $0x28] sm:$0xf]
        %v673 = vld [vmem:[%s2 + $0x2c] sm:$0xf]
        %v674 = vld [vmem:[%s2 + $0x30] sm:$0xf]
        %v675 = vld [vmem:[%s2 + $0x34] sm:$0xf]
        %v676 = vld [vmem:[%s2 + $0x38] sm:$0xf]
        %v677 = vld [vmem:[%s2 + $0x3c] sm:$0xf]
        %v678 = vld [vmem:[%s3] sm:$0x1]
        %v680 = vlaneseq
        %v681 = vshrl.u32 %v680, 7
        %v682 = vsub.s32 0, %v681
        %v683 = vrot.slane %v678, %v682
        %v701 = vunpack.c.l.b16 %v662
        %v702 = vunpack.c.l.b16 %v663
        %v703 = vunpack.c.l.b16 %v664
        %v704 = vunpack.c.l.b16 %v665
        %v705 = vunpack.c.l.b16 %v666
        %v706 = vunpack.c.l.b16 %v667
        %v707 = vunpack.c.l.b16 %v668
        %v708 = vunpack.c.l.b16 %v669
        %v709 = vunpack.c.l.b16 %v670
        %v710 = vunpack.c.l.b16 %v671
        %v711 = vunpack.c.l.b16 %v672
        %v712 = vunpack.c.l.b16 %v673
        %v713 = vunpack.c.l.b16 %v674
        %v714 = vunpack.c.l.b16 %v675
        %v715 = vunpack.c.l.b16 %v676
        %v716 = vunpack.c.l.b16 %v677
        %v717 = vpack.c.b16 %v702, %v701
        %v718 = vpack.c.b16 %v704, %v703
        %v719 = vpack.c.b16 %v706, %v705
        %v720 = vpack.c.b16 %v708, %v707
        %v721 = vpack.c.b16 %v710, %v709
        %v722 = vpack.c.b16 %v712, %v711
        %v723 = vpack.c.b16 %v714, %v713
        %v724 = vpack.c.b16 %v716, %v715
        %733 = vmatprep.subr.bf16.mxu0 0
        %734 = vmatpush1.bf16.msra.mxu0 %v717
        %735 = vmatprep.subr.bf16.mxu0 0
        %736 = vmatpush1.bf16.msra.mxu0 %v718
        %737 = vmatprep.subr.bf16.mxu0 0
        %738 = vmatpush1.bf16.msra.mxu0 %v719
        %739 = vmatprep.subr.bf16.mxu0 0
        %740 = vmatpush1.bf16.msra.mxu0 %v720
        %741 = vmatprep.subr.bf16.mxu0 0
        %742 = vmatpush1.bf16.msra.mxu0 %v721
        %743 = vmatprep.subr.bf16.mxu0 0
        %744 = vmatpush1.bf16.msra.mxu0 %v722
        %745 = vmatprep.subr.bf16.mxu0 0
        %746 = vmatpush1.bf16.msra.mxu0 %v723
        %747 = vmatprep.subr.bf16.mxu0 0
        %748 = vmatpush1.bf16.msra.mxu0 %v724
        %749 = vmatprep.subr.bf16.mxu0 0
        %750 = vmatpush1.bf16.msra.mxu0 0
        %751 = vmatprep.subr.bf16.mxu0 0
        %752 = vmatpush1.bf16.msra.mxu0 0
        %753 = vmatprep.subr.bf16.mxu0 0
        %754 = vmatpush1.bf16.msra.mxu0 0
        %755 = vmatprep.subr.bf16.mxu0 0
        %756 = vmatpush1.bf16.msra.mxu0 0
        %757 = vmatprep.subr.bf16.mxu0 0
        %758 = vmatpush1.bf16.msra.mxu0 0
        %759 = vmatprep.subr.bf16.mxu0 0
        %760 = vmatpush1.bf16.msra.mxu0 0
        %761 = vmatprep.subr.bf16.mxu0 0
        %762 = vmatpush1.bf16.msra.mxu0 0
        %763 = vmatprep.subr.bf16.mxu0 0
        %764 = vmatpush1.bf16.msra.mxu0 0
        %765 = vmatprep.mubr.bf16.mxu0 0
        %766 = vmatmul.mubr.bf16.gmra.mrb[0].mxu0 %v654
        %v767 = vpop.f32.mrb[0].mxu0
        %v768 = vadd.f32 %v683, %v767
        %v769 = vpop.f32.mrb[0].mxu0
        %v770 = vpop.f32.mrb[0].mxu0
        %v771 = vadd.f32 %v683, %v770
        %v772 = vpop.f32.mrb[0].mxu0
        %773 = vmatprep.mubr.bf16.mxu0 0
        %774 = vmatmul.mubr.bf16.gmra.mrb[0].mxu0 %v655
        %v775 = vpop.f32.mrb[0].mxu0
        %v776 = vadd.f32 %v683, %v775
        %v777 = vpop.f32.mrb[0].mxu0
        %v778 = vpop.f32.mrb[0].mxu0
        %v779 = vadd.f32 %v683, %v778
        %v780 = vpop.f32.mrb[0].mxu0
        %781 = vmatprep.mubr.bf16.mxu0 0
        %782 = vmatmul.mubr.bf16.gmra.mrb[0].mxu0 %v656
        %v783 = vpop.f32.mrb[0].mxu0
        %v784 = vadd.f32 %v683, %v783
        %v785 = vpop.f32.mrb[0].mxu0
        %v786 = vpop.f32.mrb[0].mxu0
        %v787 = vadd.f32 %v683, %v786
        %v788 = vpop.f32.mrb[0].mxu0
        %789 = vmatprep.mubr.bf16.mxu0 0
        %790 = vmatmul.mubr.bf16.gmra.mrb[0].mxu0 %v657
        %v791 = vpop.f32.mrb[0].mxu0
        %v792 = vadd.f32 %v683, %v791
        %v793 = vpop.f32.mrb[0].mxu0
        %v794 = vpop.f32.mrb[0].mxu0
        %v795 = vadd.f32 %v683, %v794
        %v796 = vpop.f32.mrb[0].mxu0
        %797 = vmatprep.mubr.bf16.mxu0 0
        %798 = vmatmul.mubr.bf16.gmra.mrb[0].mxu0 %v658
        %v799 = vpop.f32.mrb[0].mxu0
        %v800 = vadd.f32 %v683, %v799
        %v801 = vpop.f32.mrb[0].mxu0
        %v802 = vpop.f32.mrb[0].mxu0
        %v803 = vadd.f32 %v683, %v802
        %v804 = vpop.f32.mrb[0].mxu0
        %805 = vmatprep.mubr.bf16.mxu0 0
        %806 = vmatmul.mubr.bf16.gmra.mrb[0].mxu0 %v659
        %v807 = vpop.f32.mrb[0].mxu0
        %v808 = vadd.f32 %v683, %v807
        %v809 = vpop.f32.mrb[0].mxu0
        %v810 = vpop.f32.mrb[0].mxu0
        %v811 = vadd.f32 %v683, %v810
        %v812 = vpop.f32.mrb[0].mxu0
        %813 = vmatprep.mubr.bf16.mxu0 0
        %814 = vmatmul.mubr.bf16.gmra.mrb[0].mxu0 %v660
        %v815 = vpop.f32.mrb[0].mxu0
        %v816 = vadd.f32 %v683, %v815
        %v817 = vpop.f32.mrb[0].mxu0
        %v818 = vpop.f32.mrb[0].mxu0
        %v819 = vadd.f32 %v683, %v818
        %v820 = vpop.f32.mrb[0].mxu0
        %821 = vmatprep.mubr.bf16.mxu0 0
        %822 = vmatmul.mubr.bf16.gmra.mrb[0].mxu0 %v661
        %v823 = vpop.f32.mrb[0].mxu0
        %v824 = vadd.f32 %v683, %v823
        %v825 = vpop.f32.mrb[0].mxu0
        %v826 = vpop.f32.mrb[0].mxu0
        %v827 = vadd.f32 %v683, %v826
        %v828 = vpop.f32.mrb[0].mxu0
        %829 = vdwg.mxu0
        %v830 = vtanh.pop %v768
        %v831 = vtanh.pop %v771
        %v832 = vtanh.pop %v776
        %v833 = vtanh.pop %v779
        %v834 = vtanh.pop %v784
        %v835 = vtanh.pop %v787
        %v836 = vtanh.pop %v792
        %v837 = vtanh.pop %v795
        %v838 = vtanh.pop %v800
        %v839 = vtanh.pop %v803
        %v840 = vtanh.pop %v808
        %v841 = vtanh.pop %v811
        %v842 = vtanh.pop %v816
        %v843 = vtanh.pop %v819
        %v844 = vtanh.pop %v824
        %v845 = vtanh.pop %v827
        %v846 = vld [vmem:[#allocation2] sm:$0xff]
        %v847 = vadd.f32 %v830, %v831
        %v848 = vrot.slane %v847, 4
        %v849 = vadd.f32 %v847, %v848
        %v850 = vrot.slane %v849, 2
        %v851 = vadd.f32 %v849, %v850
        %v852 = vrot.slane %v851, 1
        %v853 = vadd.f32 %v851, %v852
        %v854 = vadd.f32 %v832, %v833
        %v855 = vrot.slane %v854, 4
        %v856 = vadd.f32 %v854, %v855
        %v857 = vrot.slane %v856, 2
        %v858 = vadd.f32 %v856, %v857
        %v859 = vrot.slane %v858, 1
        %v860 = vadd.f32 %v858, %v859
        %v861 = vadd.f32 %v834, %v835
        %v862 = vrot.slane %v861, 4
        %v863 = vadd.f32 %v861, %v862
        %v864 = vrot.slane %v863, 2
        %v865 = vadd.f32 %v863, %v864
        %v866 = vrot.slane %v865, 1
        %v867 = vadd.f32 %v865, %v866
        %v868 = vadd.f32 %v836, %v837
        %v869 = vrot.slane %v868, 4
        %v870 = vadd.f32 %v868, %v869
        %v871 = vrot.slane %v870, 2
        %v872 = vadd.f32 %v870, %v871
        %v873 = vrot.slane %v872, 1
        %v874 = vadd.f32 %v872, %v873
        %v875 = vadd.f32 %v838, %v839
        %v876 = vrot.slane %v875, 4
        %v877 = vadd.f32 %v875, %v876
        %v878 = vrot.slane %v877, 2
        %v879 = vadd.f32 %v877, %v878
        %v880 = vrot.slane %v879, 1
        %v881 = vadd.f32 %v879, %v880
        %v882 = vadd.f32 %v840, %v841
        %v883 = vrot.slane %v882, 4
        %v884 = vadd.f32 %v882, %v883
        %v885 = vrot.slane %v884, 2
        %v886 = vadd.f32 %v884, %v885
        %v887 = vrot.slane %v886, 1
        %v888 = vadd.f32 %v886, %v887
        %v889 = vadd.f32 %v842, %v843
        %v890 = vrot.slane %v889, 4
        %v891 = vadd.f32 %v889, %v890
        %v892 = vrot.slane %v891, 2
        %v893 = vadd.f32 %v891, %v892
        %v894 = vrot.slane %v893, 1
        %v895 = vadd.f32 %v893, %v894
        %v896 = vadd.f32 %v844, %v845
        %v897 = vrot.slane %v896, 4
        %v898 = vadd.f32 %v896, %v897
        %v899 = vrot.slane %v898, 2
        %v900 = vadd.f32 %v898, %v899
        %v901 = vrot.slane %v900, 1
        %v902 = vadd.f32 %v900, %v901
        %vm911 = vcmask 1041409
        %v912 = vsel %vm911, %v860, %v853
        %vm913 = vcmask 1042434
        %v914 = vsel %vm913, %v867, %v912
        %vm915 = vcmask 1043459
        %v916 = vsel %vm915, %v874, %v914
        %vm917 = vcmask 1044484
        %v918 = vsel %vm917, %v881, %v916
        %vm919 = vcmask 1045509
        %v920 = vsel %vm919, %v888, %v918
        %vm921 = vcmask 1046534
        %v922 = vsel %vm921, %v895, %v920
        %vm923 = vcmask 1047559
        %v924 = vsel %vm923, %v902, %v922
        %v926 = vadd.f32 %v846, %v924
        %927 = vst [vmem:[#allocation2] sm:$0xff] %v926
        %p928 = scmp.eq.s32.totalorder %s23, 1
        // Predicated region
        $region87: #{tpu_custom_call.1} parent=77 // pred_check
          %p929 = pneg %p928
        $region88: #{tpu_custom_call.1} parent=77 // pred_check_branch
          %931 = sbr.rel (%p929) target = $region90
        $region89: #{tpu_custom_call.1} parent=77 // pred_region
          %v932 = vld [vmem:[#allocation2] sm:$0xff]
          %v941 = vrot.slane %v831, 7
          %v942 = vrot.slane %v833, 6
          %v943 = vsel %vm911, %v942, %v941
          %v944 = vrot.slane %v835, 5
          %v945 = vsel %vm913, %v944, %v943
          %v946 = vrot.slane %v837, 4
          %v947 = vsel %vm915, %v946, %v945
          %v948 = vrot.slane %v839, 3
          %v949 = vsel %vm917, %v948, %v947
          %v950 = vrot.slane %v841, 2
          %v951 = vsel %vm919, %v950, %v949
          %v952 = vrot.slane %v843, 1
          %v953 = vsel %vm921, %v952, %v951
          %v954 = vsel %vm923, %v845, %v953
          %v956 = vsub.f32 %v932, %v954
          %v957 = vld [vmem:[%s4] sm:$0x1]
          %v959 = vlaneseq
          %v960 = vshrl.u32 %v959, 7
          %v961 = vsub.s32 0, %v960
          %v962 = vrot.slane %v957, %v961
          %v964 = vmul.f32 %v956, %v962
          %965 = vadd.xlane.f32.xlu0 %v964
          %v966 = vpop.xlane.xlu0 %965
          %v967 = vmul.f32 %v966, 0.032258064
          %s968 = sld [smem:[#allocation3]]
          %v969 = vstv %s968
          %v970 = vadd.f32 %v967, %v969
          %vm971 = vcmask 7168
          %972 = vst.msk [vmem:[%s364] sm:$0xff] %vm971, %v970
        $region90: #{tpu_custom_call.1} parent=77 // pred_fallthru
          _
        %p973 = scmp.lt.s32.totalorder %s22, 1
        %s974 = scalar_select %p973, %s22, 1
        %s975 = smul.addr %s974, 8
        %s976 = scalar_lea.vmem %s6, %s975
        // Predicated region
        $region91: #{tpu_custom_call.1} parent=77 // pred_check
          %p977 = pneg %p181
        $region92: #{tpu_custom_call.1} parent=77 // pred_check_branch
          %979 = sbr.rel (%p977) target = $region94
        $region93: #{tpu_custom_call.1} parent=77 // pred_region
          _
        $region94: #{tpu_custom_call.1} parent=77 // pred_fallthru
          _
      $region78: #{tpu_custom_call.1} parent=5 // pred_fallthru
        _
      %p980 = scmp.le.s32.totalorder 2, %s13
      // Predicated region
      $region95: #{tpu_custom_call.1} parent=5 // pred_check
        %p981 = pneg %p980
      $region96: #{tpu_custom_call.1} parent=5 // pred_check_branch
        %983 = sbr.rel (%p981) target = $region98
      $region97: #{tpu_custom_call.1} parent=5 // pred_region
        %s984 = ssub.s32 %s13, 2
        // Predicated region
        $region99: #{tpu_custom_call.1} parent=97 // pred_check
          %p985 = pneg %p187
        $region100: #{tpu_custom_call.1} parent=97 // pred_check_branch
          %987 = sbr.rel (%p985) target = $region102
        $region101: #{tpu_custom_call.1} parent=97 // pred_region
          %p988 = scmp.lt.s32.totalorder %s24, 1
          %s989 = scalar_select %p988, %s24, 1
          %s990 = smul.addr %s989, 8
          %s991 = scalar_lea.vmem %s6, %s990
        $region102: #{tpu_custom_call.1} parent=97 // pred_fallthru
          _
      $region98: #{tpu_custom_call.1} parent=5 // pred_fallthru
        _
    $region6: #{tpu_custom_call.1} parent=1 // loop_footer
      %s17 = sadd.s32 1, %s13
    $region7: #{tpu_custom_call.1} parent=1 // loop_footer_branch
      %12 = sbr.rel target = $region3
    $region8: #{tpu_custom_call.1} parent=1 // loop_exit
      _

</llo_original>
